<compile_context>
chip_gen: v6e
topology: v6e:2x2x1
jax: 0.10.0
libtpu: 0.0.40
codegen_flags: <defaults>
</compile_context>

<pallas_src>
import jax
import jax.numpy as jnp
from jax.experimental import pallas as pl
from jax.experimental.pallas import tpu as pltpu

EPS = 1e-12  # BERT-style LayerNorm epsilon used by this codebase's LayerNorm


def _round_up(n, m):
    return ((n + m - 1) // m) * m


def _layernorm_kernel(x_ref, g_ref, b_ref, o_ref):
    # x_ref: (TM, D) tile of rows (native dtype); g_ref/b_ref: (1, D) f32 params.
    x = x_ref[...].astype(jnp.float32)
    mean = jnp.mean(x, axis=-1, keepdims=True)
    xc = x - mean
    var = jnp.mean(xc * xc, axis=-1, keepdims=True)
    inv = jax.lax.rsqrt(var + EPS)
    o_ref[...] = (xc * inv * g_ref[...] + b_ref[...]).astype(o_ref.dtype)


def layernorm_pallas(x2d, gamma, beta, *, tm=1024):
    """x2d: (R, D), any float/int dtype. gamma/beta: (D,). Returns (R, D) float32."""
    R, D = x2d.shape
    # Keep the row tile a multiple of 8 (sublane) but never wastefully larger
    # than the (rounded-up) row count; big inputs get the full tm.
    tm = min(tm, _round_up(R, 8))
    grid_rows = pl.cdiv(R, tm)

    g2d = jnp.asarray(gamma, dtype=jnp.float32).reshape(1, D)
    b2d = jnp.asarray(beta, dtype=jnp.float32).reshape(1, D)

    in_bytes = R * D * jnp.dtype(x2d.dtype).itemsize
    out_bytes = R * D * 4
    param_bytes = 2 * D * 4
    cost = pl.CostEstimate(
        flops=7 * R * D,
        transcendentals=R,
        bytes_accessed=in_bytes + out_bytes + param_bytes,
    )

    return pl.pallas_call(
        _layernorm_kernel,
        out_shape=jax.ShapeDtypeStruct((R, D), jnp.float32),
        grid_spec=pltpu.PrefetchScalarGridSpec(
            num_scalar_prefetch=0,
            grid=(grid_rows,),
            in_specs=[
                pl.BlockSpec((tm, D), lambda i: (i, 0)),
                pl.BlockSpec((1, D), lambda i: (0, 0)),
                pl.BlockSpec((1, D), lambda i: (0, 0)),
            ],
            out_specs=pl.BlockSpec((tm, D), lambda i: (i, 0)),
        ),
        compiler_params=pltpu.CompilerParams(
            dimension_semantics=("parallel",)
        ),
        cost_estimate=cost,
    )(x2d, g2d, b2d)


def normalize_audio(audio, gamma, beta):
    """Equivalent of NormalizeAudio.forward.

    audio: any-shaped array with trailing dims (T, D), any numeric dtype.
    Returns float32 array of shape (-1, T, D), layer-normalized over D.
    """
    audio = jnp.asarray(audio)                 # keep native dtype; cast in-kernel
    T, D = audio.shape[-2], audio.shape[-1]
    x2d = audio.reshape(-1, D)                 # rows = prod(leading dims) * T
    y2d = layernorm_pallas(x2d, gamma, beta)
    B = x2d.shape[0] // T
    return y2d.reshape(B, T, D)                # view(-1, T, D)


def _reference(audio, gamma, beta):
    ref = jnp.asarray(audio, dtype=jnp.float32)
    T, D = ref.shape[-2], ref.shape[-1]
    ref = ref.reshape(-1, T, D)
    mean = ref.mean(axis=-1, keepdims=True)
    var = ((ref - mean) ** 2).mean(axis=-1, keepdims=True)
    return (ref - mean) / jnp.sqrt(var + EPS) * gamma + beta


if __name__ == "__main__":
    key = jax.random.PRNGKey(0)

    # Deterministic LayerNorm params (nn.LayerNorm init: ones / zeros),
    # perturbed slightly so gamma/beta actually matter in the check.
    audio_dim = 128
    gamma = jnp.ones((audio_dim,), dtype=jnp.float32) + 0.01 * jnp.arange(audio_dim, dtype=jnp.float32) / audio_dim
    beta = 0.1 * jnp.ones((audio_dim,), dtype=jnp.float32)

    # Case 1: small f32 input consistent with the module (audio_dim=128, seq=8).
    k1, k2 = jax.random.split(key)
    B_outer, extra, T = 2, 4, 8
    audio_f32 = jax.random.normal(k1, (B_outer, extra, T, audio_dim), dtype=jnp.float32)
    out1 = jax.block_until_ready(normalize_audio(audio_f32, gamma, beta))
    ref1 = _reference(audio_f32, gamma, beta)
    assert out1.shape == (B_outer * extra, T, audio_dim)
    assert out1.dtype == jnp.float32
    assert jnp.max(jnp.abs(out1 - ref1)) < 1e-4

    # Case 2: bf16 input with a row count that is NOT a multiple of 8,
    # exercising the native-dtype path and the masked partial tile.
    audio_bf16 = jax.random.normal(k2, (3, 7, audio_dim), dtype=jnp.float32).astype(jnp.bfloat16)
    out2 = jax.block_until_ready(normalize_audio(audio_bf16, gamma, beta))
    ref2 = _reference(audio_bf16, gamma, beta)
    assert out2.shape == (3, 7, audio_dim)
    assert out2.dtype == jnp.float32
    assert jnp.max(jnp.abs(out2 - ref2)) < 5e-2  # bf16 input precision

    print("KERNEL_OK")
</pallas_src>

<mosaic_0001>
module attributes {stable_mosaic.version = 11 : i64} {
  func.func @_layernorm_kernel(%arg0: i32, %arg1: memref<64x128xf32, #tpu.memory_space<vmem>>, %arg2: memref<1x128xf32, #tpu.memory_space<vmem>>, %arg3: memref<1x128xf32, #tpu.memory_space<vmem>>, %arg4: memref<64x128xf32, #tpu.memory_space<vmem>>) attributes {dimension_semantics = [#tpu.dimension_semantics<parallel>], iteration_bounds = array<i64: 1>, scalar_prefetch = 0 : i64, scratch_operands = 0 : i64, tpu.core_type = #tpu.core_type<tc>, window_params = [{transform_indices = @transform_0, window_bounds = array<i64: 64, 128>}, {pipeline_mode = #tpu.pipeline_mode<synchronous>, transform_indices = @transform_1, window_bounds = array<i64: 1, 128>}, {pipeline_mode = #tpu.pipeline_mode<synchronous>, transform_indices = @transform_2, window_bounds = array<i64: 1, 128>}, {transform_indices = @transform_3, window_bounds = array<i64: 64, 128>}]} {
    %c0 = arith.constant 0 : index
    %c0_0 = arith.constant 0 : index
    %0 = vector.load %arg1[%c0, %c0_0] : memref<64x128xf32, #tpu.memory_space<vmem>>, vector<64x128xf32>
    %cst = arith.constant dense<0.000000e+00> : vector<64xf32>
    %1 = vector.multi_reduction <add>, %0, %cst [1] : vector<64x128xf32> to vector<64xf32>
    %2 = vector.shape_cast %1 : vector<64xf32> to vector<64x1xf32>
    %cst_1 = arith.constant 1.280000e+02 : f32
    %3 = vector.broadcast %cst_1 : f32 to vector<64x1xf32>
    %4 = arith.divf %2, %3 : vector<64x1xf32>
    %5 = vector.broadcast %4 : vector<64x1xf32> to vector<64x128xf32>
    %6 = arith.subf %0, %5 : vector<64x128xf32>
    %7 = arith.mulf %6, %6 : vector<64x128xf32>
    %cst_2 = arith.constant dense<0.000000e+00> : vector<64xf32>
    %8 = vector.multi_reduction <add>, %7, %cst_2 [1] : vector<64x128xf32> to vector<64xf32>
    %9 = vector.shape_cast %8 : vector<64xf32> to vector<64x1xf32>
    %cst_3 = arith.constant 1.280000e+02 : f32
    %10 = vector.broadcast %cst_3 : f32 to vector<64x1xf32>
    %11 = arith.divf %9, %10 : vector<64x1xf32>
    %cst_4 = arith.constant 9.99999996E-13 : f32
    %12 = vector.broadcast %cst_4 : f32 to vector<64x1xf32>
    %13 = arith.addf %11, %12 : vector<64x1xf32>
    %14 = math.rsqrt %13 : vector<64x1xf32>
    %15 = vector.broadcast %14 : vector<64x1xf32> to vector<64x128xf32>
    %16 = arith.mulf %6, %15 : vector<64x128xf32>
    %c0_5 = arith.constant 0 : index
    %c0_6 = arith.constant 0 : index
    %17 = vector.load %arg2[%c0_5, %c0_6] : memref<1x128xf32, #tpu.memory_space<vmem>>, vector<1x128xf32>
    %18 = vector.broadcast %17 : vector<1x128xf32> to vector<64x128xf32>
    %19 = arith.mulf %16, %18 : vector<64x128xf32>
    %c0_7 = arith.constant 0 : index
    %c0_8 = arith.constant 0 : index
    %20 = vector.load %arg3[%c0_7, %c0_8] : memref<1x128xf32, #tpu.memory_space<vmem>>, vector<1x128xf32>
    %21 = vector.broadcast %20 : vector<1x128xf32> to vector<64x128xf32>
    %22 = arith.addf %19, %21 : vector<64x128xf32>
    %c0_9 = arith.constant 0 : index
    %c0_10 = arith.constant 0 : index
    %23 = vector.load %arg4[%c0_9, %c0_10] : memref<64x128xf32, #tpu.memory_space<vmem>>, vector<64x128xf32>
    tpu.vector_store %arg4[%c0_9, %c0_10], %22 {strides = array<i32>} : memref<64x128xf32, #tpu.memory_space<vmem>>, vector<64x128xf32>,
    return
  }
  func.func @transform_0(%arg0: i32) -> (i32, i32) {
    %c0_i32 = arith.constant 0 : i32
    %c0_i32_0 = arith.constant 0 : i32
    return %arg0, %c0_i32 : i32, i32
  }
  func.func @transform_1(%arg0: i32) -> (i32, i32) {
    %c0_i32 = arith.constant 0 : i32
    %c0_i32_0 = arith.constant 0 : i32
    %c0_i32_1 = arith.constant 0 : i32
    return %c0_i32, %c0_i32_0 : i32, i32
  }
  func.func @transform_2(%arg0: i32) -> (i32, i32) {
    %c0_i32 = arith.constant 0 : i32
    %c0_i32_0 = arith.constant 0 : i32
    %c0_i32_1 = arith.constant 0 : i32
    return %c0_i32, %c0_i32_0 : i32, i32
  }
  func.func @transform_3(%arg0: i32) -> (i32, i32) {
    %c0_i32 = arith.constant 0 : i32
    %c0_i32_0 = arith.constant 0 : i32
    return %arg0, %c0_i32 : i32, i32
  }
}

</mosaic_0001>

<llo_original>
// kernel: tpu_custom_call.1
$region0: #{tpu_custom_call.1}
  #allocation0 [shape = 'u32[]', space=smem, size = 0x4, offset = 0x4, fixed_abs, tag = 'smem constant byte address 0x4 - core index']
  #allocation1 [shape = 'u32[144,128]{1,0:T(1,128)}', space=vmem, size = 0x12000, scoped, tag = 'internal scratch']
  %s0 = inlined_call_operand.hbm [shape: f32[64,128], index: 0, kind: input, shape index: {}]
  %s1 = inlined_call_operand.vmem [shape: f32[1,128], index: 1, kind: input, shape index: {}]
  %s2 = inlined_call_operand.vmem [shape: f32[1,128], index: 2, kind: input, shape index: {}]
  %s3 = inlined_call_operand.hbm [shape: f32[64,128], index: 3, kind: output, shape index: {}]
  %s4 = sld [smem:[#allocation0]]
  $region26: #{tpu_custom_call.1} parent=0
    _
  %s6 = ssub.s32 1, %s4
  %s7 = scalar_select 0, %s6, %s4
  $region1: #{tpu_custom_call.1} parent=0
    #allocation2 [shape = 'u8[32768]{0}', space=vmem, size = 0x8000, scoped, tag = 'input window, operand 0, single buffered']
    #allocation3 [shape = 's32[1]{0}', space=sflag, size = 0x4, scoped, tag = 'scoped memory for tpu_custom_call.1']
    #allocation4 [shape = 's32[1]{0}', space=sflag, size = 0x4, scoped, tag = 'scoped memory for tpu_custom_call.1']
    #allocation5 [shape = 'u8[32768]{0}', space=vmem, size = 0x8000, scoped, tag = 'output window, operand 0, single buffered']
    %8 = vsyncpa [#allocation3], 0
    %9 = vsyncpa [#allocation4], 0
    // Predicated region
    $region2: #{tpu_custom_call.1} parent=1 // pred_check
      _
    $region3: #{tpu_custom_call.1} parent=1 // pred_check_branch
      %11 = sbr.rel (0) target = $region5
    $region4: #{tpu_custom_call.1} parent=1 // pred_region
      %s13 = ssub.s32 1024, 1024
      %14 = vsyncadd [#allocation3], %s13
      %s15 = sshll.u32 [#allocation2], 4
      %s16 = int_to_ptr.vmem [resolvable:$true] %s15
      %21 = dma.hbm_to_vmem [thread:$0]  %s0, 1024, %s16, [#allocation3], 128, 128, 8
    $region5: #{tpu_custom_call.1} parent=1 // pred_fallthru
      _
    // Predicated region
    $region6: #{tpu_custom_call.1} parent=1 // pred_check
      _
    $region7: #{tpu_custom_call.1} parent=1 // pred_check_branch
      %23 = sbr.rel (0) target = $region9
    $region8: #{tpu_custom_call.1} parent=1 // pred_region
      _
    $region9: #{tpu_custom_call.1} parent=1 // pred_fallthru
      _
    // Predicated region
    $region10: #{tpu_custom_call.1} parent=1 // pred_check
      _
    $region11: #{tpu_custom_call.1} parent=1 // pred_check_branch
      %25 = sbr.rel (0) target = $region13
    $region12: #{tpu_custom_call.1} parent=1 // pred_region
      _
    $region13: #{tpu_custom_call.1} parent=1 // pred_fallthru
      _
    // Predicated region
    $region14: #{tpu_custom_call.1} parent=1 // pred_check
      _
    $region15: #{tpu_custom_call.1} parent=1 // pred_check_branch
      %27 = sbr.rel (0) target = $region17
    $region16: #{tpu_custom_call.1} parent=1 // pred_region
      %28 = dma.done [#allocation3], 1024
    $region17: #{tpu_custom_call.1} parent=1 // pred_fallthru
      _
    %v29 = vld [vmem:[#allocation2] sm:$0xff]
    %v30 = vld [vmem:[#allocation2 + $0x8] sm:$0xff]
    %v31 = vld [vmem:[#allocation2 + $0x10] sm:$0xff]
    %v32 = vld [vmem:[#allocation2 + $0x18] sm:$0xff]
    %v33 = vld [vmem:[#allocation2 + $0x20] sm:$0xff]
    %v34 = vld [vmem:[#allocation2 + $0x28] sm:$0xff]
    %v35 = vld [vmem:[#allocation2 + $0x30] sm:$0xff]
    %v36 = vld [vmem:[#allocation2 + $0x38] sm:$0xff]
    %37 = vadd.xlane.f32.xlu0 %v29
    %v38 = vpop.xlane.xlu0 %37
    %39 = vadd.xlane.f32.xlu0 %v30
    %v40 = vpop.xlane.xlu0 %39
    %41 = vadd.xlane.f32.xlu0 %v31
    %v42 = vpop.xlane.xlu0 %41
    %43 = vadd.xlane.f32.xlu0 %v32
    %v44 = vpop.xlane.xlu0 %43
    %45 = vadd.xlane.f32.xlu0 %v33
    %v46 = vpop.xlane.xlu0 %45
    %47 = vadd.xlane.f32.xlu0 %v34
    %v48 = vpop.xlane.xlu0 %47
    %49 = vadd.xlane.f32.xlu0 %v35
    %v50 = vpop.xlane.xlu0 %49
    %51 = vadd.xlane.f32.xlu0 %v36
    %v52 = vpop.xlane.xlu0 %51
    %v53 = vrcp.pop 128.0
    %v54 = vmul.f32 %v38, %v53
    %v55 = vmul.f32 %v40, %v53
    %v56 = vmul.f32 %v42, %v53
    %v57 = vmul.f32 %v44, %v53
    %v58 = vmul.f32 %v46, %v53
    %v59 = vmul.f32 %v48, %v53
    %v60 = vmul.f32 %v50, %v53
    %v61 = vmul.f32 %v52, %v53
    %v62 = vsub.f32 %v29, %v54
    %v63 = vsub.f32 %v30, %v55
    %v64 = vsub.f32 %v31, %v56
    %v65 = vsub.f32 %v32, %v57
    %v66 = vsub.f32 %v33, %v58
    %v67 = vsub.f32 %v34, %v59
    %v68 = vsub.f32 %v35, %v60
    %v69 = vsub.f32 %v36, %v61
    %v70 = vmul.f32 %v62, %v62
    %v71 = vmul.f32 %v63, %v63
    %v72 = vmul.f32 %v64, %v64
    %v73 = vmul.f32 %v65, %v65
    %v74 = vmul.f32 %v66, %v66
    %v75 = vmul.f32 %v67, %v67
    %v76 = vmul.f32 %v68, %v68
    %v77 = vmul.f32 %v69, %v69
    %78 = vadd.xlane.f32.xlu0 %v70
    %v79 = vpop.xlane.xlu0 %78
    %80 = vadd.xlane.f32.xlu0 %v71
    %v81 = vpop.xlane.xlu0 %80
    %82 = vadd.xlane.f32.xlu0 %v72
    %v83 = vpop.xlane.xlu0 %82
    %84 = vadd.xlane.f32.xlu0 %v73
    %v85 = vpop.xlane.xlu0 %84
    %86 = vadd.xlane.f32.xlu0 %v74
    %v87 = vpop.xlane.xlu0 %86
    %88 = vadd.xlane.f32.xlu0 %v75
    %v89 = vpop.xlane.xlu0 %88
    %90 = vadd.xlane.f32.xlu0 %v76
    %v91 = vpop.xlane.xlu0 %90
    %92 = vadd.xlane.f32.xlu0 %v77
    %v93 = vpop.xlane.xlu0 %92
    %v94 = vmul.f32 %v79, %v53
    %v95 = vmul.f32 %v81, %v53
    %v96 = vmul.f32 %v83, %v53
    %v97 = vmul.f32 %v85, %v53
    %v98 = vmul.f32 %v87, %v53
    %v99 = vmul.f32 %v89, %v53
    %v100 = vmul.f32 %v91, %v53
    %v101 = vmul.f32 %v93, %v53
    %v102 = vadd.f32 %v94, 1e-12
    %v103 = vadd.f32 %v95, 1e-12
    %v104 = vadd.f32 %v96, 1e-12
    %v105 = vadd.f32 %v97, 1e-12
    %v106 = vadd.f32 %v98, 1e-12
    %v107 = vadd.f32 %v99, 1e-12
    %v108 = vadd.f32 %v100, 1e-12
    %v109 = vadd.f32 %v101, 1e-12
    %v110 = vrsqrt.pop %v102
    %v111 = vrsqrt.pop %v103
    %v112 = vrsqrt.pop %v104
    %v113 = vrsqrt.pop %v105
    %v114 = vrsqrt.pop %v106
    %v115 = vrsqrt.pop %v107
    %v116 = vrsqrt.pop %v108
    %v117 = vrsqrt.pop %v109
    %v118 = vmul.f32 %v62, %v110
    %v119 = vmul.f32 %v63, %v111
    %v120 = vmul.f32 %v64, %v112
    %v121 = vmul.f32 %v65, %v113
    %v122 = vmul.f32 %v66, %v114
    %v123 = vmul.f32 %v67, %v115
    %v124 = vmul.f32 %v68, %v116
    %v125 = vmul.f32 %v69, %v117
    %v126 = vld [vmem:[%s1] sm:$0x1]
    %v128 = vlaneseq
    %v129 = vshrl.u32 %v128, 7
    %v130 = vsub.s32 0, %v129
    %v131 = vrot.slane %v126, %v130
    %v133 = vmul.f32 %v118, %v131
    %v134 = vmul.f32 %v119, %v131
    %v135 = vmul.f32 %v120, %v131
    %v136 = vmul.f32 %v121, %v131
    %v137 = vmul.f32 %v122, %v131
    %v138 = vmul.f32 %v123, %v131
    %v139 = vmul.f32 %v124, %v131
    %v140 = vmul.f32 %v125, %v131
    %v141 = vld [vmem:[%s2] sm:$0x1]
    %v143 = vlaneseq
    %v144 = vshrl.u32 %v143, 7
    %v145 = vsub.s32 0, %v144
    %v146 = vrot.slane %v141, %v145
    %v148 = vadd.f32 %v133, %v146
    %v149 = vadd.f32 %v134, %v146
    %v150 = vadd.f32 %v135, %v146
    %v151 = vadd.f32 %v136, %v146
    %v152 = vadd.f32 %v137, %v146
    %v153 = vadd.f32 %v138, %v146
    %v154 = vadd.f32 %v139, %v146
    %v155 = vadd.f32 %v140, %v146
    %156 = vst [vmem:[#allocation5] sm:$0xff] %v148
    %157 = vst [vmem:[#allocation5 + $0x8] sm:$0xff] %v149
    %158 = vst [vmem:[#allocation5 + $0x10] sm:$0xff] %v150
    %159 = vst [vmem:[#allocation5 + $0x18] sm:$0xff] %v151
    %160 = vst [vmem:[#allocation5 + $0x20] sm:$0xff] %v152
    %161 = vst [vmem:[#allocation5 + $0x28] sm:$0xff] %v153
    %162 = vst [vmem:[#allocation5 + $0x30] sm:$0xff] %v154
    %163 = vst [vmem:[#allocation5 + $0x38] sm:$0xff] %v155
    // Predicated region
    $region18: #{tpu_custom_call.1} parent=1 // pred_check
      _
    $region19: #{tpu_custom_call.1} parent=1 // pred_check_branch
      %165 = sbr.rel (0) target = $region21
    $region20: #{tpu_custom_call.1} parent=1 // pred_region
      %s167 = ssub.s32 1024, 1024
      %168 = vsyncadd [#allocation4], %s167
      %s169 = sshll.u32 [#allocation5], 4
      %s170 = int_to_ptr.vmem [resolvable:$true] %s169
      %175 = dma.vmem_to_hbm [thread:$0]  %s170, 1024, %s3, [#allocation4], 128, 128, 8
    $region21: #{tpu_custom_call.1} parent=1 // pred_fallthru
      _
    // Predicated region
    $region22: #{tpu_custom_call.1} parent=1 // pred_check
      _
    $region23: #{tpu_custom_call.1} parent=1 // pred_check_branch
      %177 = sbr.rel (0) target = $region25
    $region24: #{tpu_custom_call.1} parent=1 // pred_region
      %178 = dma.done [#allocation4], 1024
    $region25: #{tpu_custom_call.1} parent=1 // pred_fallthru
      _
    %179 = vsyncpa [#allocation3], 1
    %180 = vsyncpa [#allocation4], 1

</llo_original>
